<compile_context>
chip_gen: v6e
topology: v6e:2x2x1
jax: 0.10.0
libtpu: 0.0.40
codegen_flags: <defaults>
</compile_context>

<pallas_src>
import jax
import jax.numpy as jnp
from jax.experimental import pallas as pl
from jax.experimental.pallas import tpu as pltpu


def _dense_kernel(x_ref, wt_ref, b_ref, o_ref, acc_ref):
    # x_ref: [tm, tk]  wt_ref: [tk, tn]  b_ref: [1, tn]  o_ref: [tm, tn]
    k = pl.program_id(2)

    @pl.when(k == 0)
    def _():
        acc_ref[...] = jnp.zeros_like(acc_ref)

    acc_ref[...] += jnp.dot(
        x_ref[...], wt_ref[...], preferred_element_type=jnp.float32
    )

    @pl.when(k == pl.num_programs(2) - 1)
    def _():
        y = acc_ref[...] + b_ref[...].astype(jnp.float32)
        o_ref[...] = jnp.maximum(y, 0.0).astype(o_ref.dtype)   # act = ReLU


def dense_forward(x, weight, bias):
    """x: [..., INP]; weight: [OUT, INP] (PyTorch Linear layout); bias: [OUT]."""
    inp = x.shape[-1]
    out = weight.shape[0]
    lead = x.shape[:-1]
    x2d = x.reshape(-1, inp)
    b = x2d.shape[0]

    itemsize = jnp.dtype(x.dtype).itemsize
    w_itemsize = jnp.dtype(weight.dtype).itemsize
    # Sublane alignment for row tiles: 8 (f32), 16 (bf16), 32 (int8/fp8).
    row_align = 8 if itemsize >= 4 else (16 if itemsize == 2 else 32)

    # ---- VMEM budget (per TensorCore) -------------------------------------
    try:
        vmem_cap = int(pltpu.get_tpu_info().vmem_capacity_bytes)
    except Exception:
        vmem_cap = 64 * 1024 * 1024          # v7x per-TC size: safe lower bound
    budget = max(min(int(vmem_cap * 0.75), 100 * 1024 * 1024), 32 * 1024 * 1024)

    # ---- N (OUT) tiling: lane-dense, 128-aligned ---------------------------
    out_128 = pl.cdiv(out, 128) * 128
    # 256-wide N tiles match v6e/v7x's 2x256 MXU; small OUT runs as one tile.
    # TODO(synk): prefer 128-wide N tiles on v5e (4x128 MXU geometry).
    tn = out_128 if out_128 <= 512 else 256
    out_pad = pl.cdiv(out_128, tn) * tn      # multiple of tn -> no ragged N

    # ---- K (INP) tiling -----------------------------------------------------
    tk = 512 if (inp >= 2048 and inp % 512 == 0) else inp
    grid_k = pl.cdiv(inp, tk)                # exact division whenever tk != inp

    # ---- M (row) tiling: fit the VMEM budget -------------------------------
    fixed = 2 * tk * tn * w_itemsize + 2 * 8 * tn * w_itemsize   # weight + bias
    per_row = 2 * (tk + tn) * itemsize + tn * 4                  # x + out + acc
    tm_cap = max((budget - fixed) // per_row, row_align)
    tm_cap = (tm_cap // row_align) * row_align
    tm_base = min(1024 if budget >= 64 * 1024 * 1024 else 512, tm_cap)

    if b < 2 * row_align:
        tile_m = b                                   # single full-dim block
    elif b <= 2 * tm_base:
        # >= 2 row tiles so ("parallel",...) can shard across both v7x TCs.
        tile_m = pl.cdiv(pl.cdiv(b, 2), row_align) * row_align
    else:
        tile_m = tm_base

    grid = (pl.cdiv(b, tile_m), out_pad // tn, grid_k)

    # One-time parameter relayout in the wrapper (hoisted/fused by XLA):
    # weight [OUT, INP] -> zero-pad OUT to OUT_pad -> transpose -> [INP, OUT_pad]
    wt = jnp.pad(weight, ((0, out_pad - out), (0, 0))).T
    b2d = jnp.pad(bias, (0, out_pad - out)).reshape(1, out_pad)

    cost = pl.CostEstimate(
        flops=2 * b * inp * out_pad,
        transcendentals=0,
        bytes_accessed=int(
            b * inp * itemsize
            + inp * out_pad * w_itemsize
            + out_pad * w_itemsize
            + b * out_pad * itemsize
        ),
    )

    y2d = pl.pallas_call(
        _dense_kernel,
        out_shape=jax.ShapeDtypeStruct((b, out_pad), x.dtype),
        grid_spec=pltpu.PrefetchScalarGridSpec(
            num_scalar_prefetch=0,
            grid=grid,
            in_specs=[
                pl.BlockSpec((tile_m, tk), lambda i, j, k: (i, k)),  # x rows
                pl.BlockSpec((tk, tn), lambda i, j, k: (k, j)),      # weight^T
                pl.BlockSpec((1, tn), lambda i, j, k: (0, j)),       # bias
            ],
            out_specs=pl.BlockSpec((tile_m, tn), lambda i, j, k: (i, j)),
            scratch_shapes=[pltpu.VMEM((tile_m, tn), jnp.float32)],
        ),
        compiler_params=pltpu.CompilerParams(
            dimension_semantics=("parallel", "parallel", "arbitrary"),
            vmem_limit_bytes=int(budget),
        ),
        cost_estimate=cost,
    )(x2d, wt, b2d)

    y = y2d[:, :out].reshape(*lead, out)

    # Passthrough concat handled by XLA outside the kernel (keeps kernel
    # output lane-dense; dropout is eval-mode identity).
    return jnp.concatenate([x, y], axis=-1)


def _reference(x, weight, bias):
    # Pure-JAX reference of the PyTorch forward (eval mode: dropout = identity).
    y = jnp.maximum(jnp.einsum("...i,oi->...o", x, weight) + bias, 0.0)
    return jnp.concatenate([x, y], axis=-1)


if __name__ == "__main__":
    key = jax.random.PRNGKey(0)
    kx, kw, kb = jax.random.split(key, 3)

    # Small shapes consistent with the module: leading batch dims (2, 4),
    # inp=32 features -> out=64 features, concat result width 96.
    B0, B1, INP, OUT = 2, 4, 32, 64
    x = jax.random.normal(kx, (B0, B1, INP), dtype=jnp.float32)
    weight = jax.random.normal(kw, (OUT, INP), dtype=jnp.float32) * 0.1
    bias = jax.random.normal(kb, (OUT,), dtype=jnp.float32) * 0.1

    y = dense_forward(x, weight, bias)
    y = jax.block_until_ready(y)
    y_ref = _reference(x, weight, bias)
    assert y.shape == (B0, B1, INP + OUT), y.shape
    assert jnp.allclose(y, y_ref, atol=1e-5, rtol=1e-5), "mismatch vs reference"

    # Second check exercising the multi-row-tile (grid_m=2, ragged last block)
    # and 256-wide lane-dense output paths.
    k2x, k2w, k2b = jax.random.split(jax.random.PRNGKey(1), 3)
    B2, INP2, OUT2 = 35, 160, 200
    x2 = jax.random.normal(k2x, (B2, INP2), dtype=jnp.float32)
    w2 = jax.random.normal(k2w, (OUT2, INP2), dtype=jnp.float32) * 0.05
    b2 = jax.random.normal(k2b, (OUT2,), dtype=jnp.float32) * 0.05
    y2 = jax.block_until_ready(dense_forward(x2, w2, b2))
    y2_ref = _reference(x2, w2, b2)
    assert y2.shape == (B2, INP2 + OUT2), y2.shape
    assert jnp.allclose(y2, y2_ref, atol=1e-4, rtol=1e-4), "mismatch vs reference (2)"

    print("KERNEL_OK")
</pallas_src>

<mosaic_0001>
module attributes {stable_mosaic.version = 11 : i64} {
  func.func @_dense_kernel(%arg0: i32, %arg1: i32, %arg2: i32, %arg3: memref<8x32xf32, #tpu.memory_space<vmem>>, %arg4: memref<32x128xf32, #tpu.memory_space<vmem>>, %arg5: memref<1x128xf32, #tpu.memory_space<vmem>>, %arg6: memref<8x128xf32, #tpu.memory_space<vmem>>, %arg7: memref<8x128xf32, #tpu.memory_space<vmem>>) attributes {dimension_semantics = [#tpu.dimension_semantics<parallel>, #tpu.dimension_semantics<parallel>, #tpu.dimension_semantics<arbitrary>], iteration_bounds = array<i64: 1, 1, 1>, scalar_prefetch = 0 : i64, scratch_operands = 1 : i64, tpu.core_type = #tpu.core_type<tc>, window_params = [{transform_indices = @transform_0, window_bounds = array<i64: 8, 32>}, {transform_indices = @transform_1, window_bounds = array<i64: 32, 128>}, {transform_indices = @transform_2, window_bounds = array<i64: 1, 128>}, {transform_indices = @transform_3, window_bounds = array<i64: 8, 128>}]} {
    %c0_i32 = arith.constant 0 : i32
    %0 = arith.cmpi eq, %arg2, %c0_i32 : i32
    %1 = arith.extui %0 : i1 to i32
    %c0_i32_0 = arith.constant 0 : i32
    %2 = arith.cmpi ne, %1, %c0_i32_0 : i32
    scf.if %2 {
      %cst_10 = arith.constant 0.000000e+00 : f32
      %12 = vector.broadcast %cst_10 : f32 to vector<8x128xf32>
      %c0_11 = arith.constant 0 : index
      %c0_12 = arith.constant 0 : index
      %13 = vector.load %arg7[%c0_11, %c0_12] : memref<8x128xf32, #tpu.memory_space<vmem>>, vector<8x128xf32>
      tpu.vector_store %arg7[%c0_11, %c0_12], %12 {strides = array<i32>} : memref<8x128xf32, #tpu.memory_space<vmem>>, vector<8x128xf32>,
    } else {
    }
    %c0 = arith.constant 0 : index
    %c0_1 = arith.constant 0 : index
    %3 = vector.load %arg7[%c0, %c0_1] : memref<8x128xf32, #tpu.memory_space<vmem>>, vector<8x128xf32>
    %c0_2 = arith.constant 0 : index
    %c0_3 = arith.constant 0 : index
    %4 = vector.load %arg3[%c0_2, %c0_3] : memref<8x32xf32, #tpu.memory_space<vmem>>, vector<8x32xf32>
    %c0_4 = arith.constant 0 : index
    %c0_5 = arith.constant 0 : index
    %5 = vector.load %arg4[%c0_4, %c0_5] : memref<32x128xf32, #tpu.memory_space<vmem>>, vector<32x128xf32>
    %cst = arith.constant dense<0.000000e+00> : vector<8x128xf32>
    %6 = tpu.matmul %4, %5, %cst {dimension_numbers = #tpu.dot_dimension_numbers<[1], [0], [0], [1], [0, 0, 1, 1], [], []>} : vector<8x32xf32>, vector<32x128xf32>, vector<8x128xf32> -> vector<8x128xf32>
    %7 = arith.addf %3, %6 : vector<8x128xf32>
    %c0_6 = arith.constant 0 : index
    %c0_7 = arith.constant 0 : index
    %8 = vector.load %arg7[%c0_6, %c0_7] : memref<8x128xf32, #tpu.memory_space<vmem>>, vector<8x128xf32>
    tpu.vector_store %arg7[%c0_6, %c0_7], %7 {strides = array<i32>} : memref<8x128xf32, #tpu.memory_space<vmem>>, vector<8x128xf32>,
    %c0_i32_8 = arith.constant 0 : i32
    %9 = arith.cmpi eq, %arg2, %c0_i32_8 : i32
    %10 = arith.extui %9 : i1 to i32
    %c0_i32_9 = arith.constant 0 : i32
    %11 = arith.cmpi ne, %10, %c0_i32_9 : i32
    scf.if %11 {
      %c0_10 = arith.constant 0 : index
      %c0_11 = arith.constant 0 : index
      %12 = vector.load %arg7[%c0_10, %c0_11] : memref<8x128xf32, #tpu.memory_space<vmem>>, vector<8x128xf32>
      %c0_12 = arith.constant 0 : index
      %c0_13 = arith.constant 0 : index
      %13 = vector.load %arg5[%c0_12, %c0_13] : memref<1x128xf32, #tpu.memory_space<vmem>>, vector<1x128xf32>
      %14 = vector.broadcast %13 : vector<1x128xf32> to vector<8x128xf32>
      %15 = arith.addf %12, %14 : vector<8x128xf32>
      %cst_14 = arith.constant 0.000000e+00 : f32
      %16 = vector.broadcast %cst_14 : f32 to vector<8x128xf32>
      %17 = arith.maximumf %15, %16 : vector<8x128xf32>
      %c0_15 = arith.constant 0 : index
      %c0_16 = arith.constant 0 : index
      %18 = vector.load %arg6[%c0_15, %c0_16] : memref<8x128xf32, #tpu.memory_space<vmem>>, vector<8x128xf32>
      tpu.vector_store %arg6[%c0_15, %c0_16], %17 {strides = array<i32>} : memref<8x128xf32, #tpu.memory_space<vmem>>, vector<8x128xf32>,
    } else {
    }
    return
  }
  func.func @transform_0(%arg0: i32, %arg1: i32, %arg2: i32) -> (i32, i32) {
    %c0_i32 = arith.constant 0 : i32
    return %arg0, %arg2 : i32, i32
  }
  func.func @transform_1(%arg0: i32, %arg1: i32, %arg2: i32) -> (i32, i32) {
    %c0_i32 = arith.constant 0 : i32
    return %arg2, %arg1 : i32, i32
  }
  func.func @transform_2(%arg0: i32, %arg1: i32, %arg2: i32) -> (i32, i32) {
    %c0_i32 = arith.constant 0 : i32
    %c0_i32_0 = arith.constant 0 : i32
    return %c0_i32, %arg1 : i32, i32
  }
  func.func @transform_3(%arg0: i32, %arg1: i32, %arg2: i32) -> (i32, i32) {
    %c0_i32 = arith.constant 0 : i32
    return %arg0, %arg1 : i32, i32
  }
}

</mosaic_0001>

<llo_original>
// kernel: tpu_custom_call.1
$region0: #{tpu_custom_call.1}
  #allocation0 [shape = 'u32[]', space=smem, size = 0x4, offset = 0x4, fixed_abs, tag = 'smem constant byte address 0x4 - core index']
  #allocation1 [shape = 'u32[144,128]{1,0:T(1,128)}', space=vmem, size = 0x12000, scoped, tag = 'internal scratch']
  #allocation2 [shape = 'f32[8,128]{1,0:T(8,128)}', space=vmem, size = 0x1000, scoped, tag = 'scratch operand']
  %s0 = inlined_call_operand.hbm [shape: f32[8,32], index: 0, kind: input, shape index: {}]
  %s1 = inlined_call_operand.hbm [shape: f32[32,128], index: 1, kind: input, shape index: {}]
  %s2 = inlined_call_operand.vmem [shape: f32[1,128], index: 2, kind: input, shape index: {}]
  %s3 = inlined_call_operand.hbm [shape: f32[8,128], index: 3, kind: output, shape index: {}]
  %s4 = sld [smem:[#allocation0]]
  $region38: #{tpu_custom_call.1} parent=0
    _
  %s6 = ssub.s32 1, %s4
  %s7 = scalar_select 0, %s6, %s4
  $region1: #{tpu_custom_call.1} parent=0
    #allocation3 [shape = 'u8[4096]{0}', space=vmem, size = 0x1000, scoped, tag = 'input window, operand 0, single buffered']
    #allocation4 [shape = 's32[1]{0}', space=sflag, size = 0x4, scoped, tag = 'scoped memory for tpu_custom_call.1']
    #allocation5 [shape = 's32[1]{0}', space=sflag, size = 0x4, scoped, tag = 'scoped memory for tpu_custom_call.1']
    #allocation6 [shape = 'u8[16384]{0}', space=vmem, size = 0x4000, scoped, tag = 'input window, operand 1, single buffered']
    #allocation7 [shape = 's32[1]{0}', space=sflag, size = 0x4, scoped, tag = 'scoped memory for tpu_custom_call.1']
    #allocation8 [shape = 'u8[4096]{0}', space=vmem, size = 0x1000, scoped, tag = 'output window, operand 0, single buffered']
    %8 = vsyncpa [#allocation4], 0
    %9 = vsyncpa [#allocation7], 0
    %10 = vsyncpa [#allocation5], 0
    // Predicated region
    $region2: #{tpu_custom_call.1} parent=1 // pred_check
      _
    $region3: #{tpu_custom_call.1} parent=1 // pred_check_branch
      %12 = sbr.rel (0) target = $region5
    $region4: #{tpu_custom_call.1} parent=1 // pred_region
      %s14 = ssub.s32 128, 128
      %15 = vsyncadd [#allocation4], %s14
      %s17 = sshll.u32 [#allocation3], 4
      %s18 = int_to_ptr.vmem [resolvable:$true] %s17
      %20 = dma.hbm_to_vmem [thread:$0]  %s0, 128, %s18, [#allocation4]
    $region5: #{tpu_custom_call.1} parent=1 // pred_fallthru
      _
    // Predicated region
    $region6: #{tpu_custom_call.1} parent=1 // pred_check
      _
    $region7: #{tpu_custom_call.1} parent=1 // pred_check_branch
      %22 = sbr.rel (0) target = $region9
    $region8: #{tpu_custom_call.1} parent=1 // pred_region
      %s24 = ssub.s32 512, 512
      %25 = vsyncadd [#allocation7], %s24
      %s26 = sshll.u32 [#allocation6], 4
      %s27 = int_to_ptr.vmem [resolvable:$true] %s26
      %32 = dma.hbm_to_vmem [thread:$0]  %s1, 512, %s27, [#allocation7], 128, 128, 8
    $region9: #{tpu_custom_call.1} parent=1 // pred_fallthru
      _
    // Predicated region
    $region10: #{tpu_custom_call.1} parent=1 // pred_check
      _
    $region11: #{tpu_custom_call.1} parent=1 // pred_check_branch
      %34 = sbr.rel (0) target = $region13
    $region12: #{tpu_custom_call.1} parent=1 // pred_region
      _
    $region13: #{tpu_custom_call.1} parent=1 // pred_fallthru
      _
    // Predicated region
    $region14: #{tpu_custom_call.1} parent=1 // pred_check
      _
    $region15: #{tpu_custom_call.1} parent=1 // pred_check_branch
      %36 = sbr.rel (0) target = $region17
    $region16: #{tpu_custom_call.1} parent=1 // pred_region
      %37 = dma.done [#allocation4], 128
    $region17: #{tpu_custom_call.1} parent=1 // pred_fallthru
      _
    // Predicated region
    $region18: #{tpu_custom_call.1} parent=1 // pred_check
      _
    $region19: #{tpu_custom_call.1} parent=1 // pred_check_branch
      %39 = sbr.rel (0) target = $region21
    $region20: #{tpu_custom_call.1} parent=1 // pred_region
      %40 = dma.done [#allocation7], 512
    $region21: #{tpu_custom_call.1} parent=1 // pred_fallthru
      _
    %p41 = scmp.eq.s32.totalorder 0, 0
    // Predicated region
    $region22: #{tpu_custom_call.1} parent=1 // pred_check
      %p42 = pneg %p41
    $region23: #{tpu_custom_call.1} parent=1 // pred_check_branch
      %44 = sbr.rel (%p42) target = $region25
    $region24: #{tpu_custom_call.1} parent=1 // pred_region
      %45 = vst [vmem:[#allocation2] sm:$0xff] 0.0
    $region25: #{tpu_custom_call.1} parent=1 // pred_fallthru
      _
    %v46 = vld [vmem:[#allocation2] sm:$0xff]
    %v47 = vld [vmem:[#allocation3] sm:$0xff]
    %v48 = vld [vmem:[#allocation6] sm:$0xff]
    %v49 = vld [vmem:[#allocation6 + $0x8] sm:$0xff]
    %v50 = vld [vmem:[#allocation6 + $0x10] sm:$0xff]
    %v51 = vld [vmem:[#allocation6 + $0x18] sm:$0xff]
    %vm52 = vcmask 261120
    %v54 = vsel %vm52, %v47, 0
    %56 = vmatprep.subr.mxu0 0.0
    %57 = vmatpush1.msra.mxu0 0.0
    %58 = vmatprep.subr.mxu0 0.0
    %59 = vmatpush1.msra.mxu0 0.0
    %60 = vmatprep.subr.mxu0 0.0
    %61 = vmatpush1.msra.mxu0 0.0
    %62 = vmatprep.subr.mxu0 0.0
    %63 = vmatpush1.msra.mxu0 0.0
    %64 = vmatprep.subr.mxu0 0.0
    %65 = vmatpush1.msra.mxu0 0.0
    %66 = vmatprep.subr.mxu0 0.0
    %67 = vmatpush1.msra.mxu0 0.0
    %68 = vmatprep.subr.mxu0 0.0
    %69 = vmatpush1.msra.mxu0 0.0
    %70 = vmatprep.subr.mxu0 0.0
    %71 = vmatpush1.msra.mxu0 0.0
    %72 = vmatprep.subr.mxu0 0.0
    %73 = vmatpush1.msra.mxu0 0.0
    %74 = vmatprep.subr.mxu0 0.0
    %75 = vmatpush1.msra.mxu0 0.0
    %76 = vmatprep.subr.mxu0 0.0
    %77 = vmatpush1.msra.mxu0 0.0
    %78 = vmatprep.subr.mxu0 0.0
    %79 = vmatpush1.msra.mxu0 0.0
    %80 = vmatprep.subr.mxu0 0.0
    %81 = vmatpush1.msra.mxu0 %v51
    %82 = vmatprep.subr.mxu0 0.0
    %83 = vmatpush1.msra.mxu0 %v50
    %84 = vmatprep.subr.mxu0 0.0
    %85 = vmatpush1.msra.mxu0 %v49
    %86 = vmatprep.subr.mxu0 0.0
    %87 = vmatpush1.msra.mxu0 %v48
    %88 = vmatprep.subr.mxu0 0.0
    %89 = vmatpush2.msra.mxu0 0.0
    %90 = vmatprep.subr.mxu0 0.0
    %91 = vmatpush2.msra.mxu0 0.0
    %92 = vmatprep.subr.mxu0 0.0
    %93 = vmatpush2.msra.mxu0 0.0
    %94 = vmatprep.subr.mxu0 0.0
    %95 = vmatpush2.msra.mxu0 0.0
    %96 = vmatprep.subr.mxu0 0.0
    %97 = vmatpush2.msra.mxu0 0.0
    %98 = vmatprep.subr.mxu0 0.0
    %99 = vmatpush2.msra.mxu0 0.0
    %100 = vmatprep.subr.mxu0 0.0
    %101 = vmatpush2.msra.mxu0 0.0
    %102 = vmatprep.subr.mxu0 0.0
    %103 = vmatpush2.msra.mxu0 0.0
    %104 = vmatprep.subr.mxu0 0.0
    %105 = vmatpush2.msra.mxu0 0.0
    %106 = vmatprep.subr.mxu0 0.0
    %107 = vmatpush2.msra.mxu0 0.0
    %108 = vmatprep.subr.mxu0 0.0
    %109 = vmatpush2.msra.mxu0 0.0
    %110 = vmatprep.subr.mxu0 0.0
    %111 = vmatpush2.msra.mxu0 0.0
    %112 = vmatprep.subr.mxu0 0.0
    %113 = vmatpush2.msra.mxu0 0.0
    %114 = vmatprep.subr.mxu0 0.0
    %115 = vmatpush2.msra.mxu0 0.0
    %116 = vmatprep.subr.mxu0 0.0
    %117 = vmatpush2.msra.mxu0 0.0
    %118 = vmatprep.subr.mxu0 0.0
    %119 = vmatpush2.msra.mxu0 0.0
    %120 = vmatprep.mubr.f32.mxu0 0.0
    %121 = vmatmul.mubr.f32.gmra.mxu0 %v54
    %v122 = vpop.f32.mrf.mxu0
    %v123 = vadd.f32 0.0, %v122
    %v124 = vpop.f32.mrf.mxu0
    %125 = vdwg.mxu0
    %v126 = vadd.f32 %v46, %v123
    %127 = vst [vmem:[#allocation2] sm:$0xff] %v126
    // Predicated region
    $region26: #{tpu_custom_call.1} parent=1 // pred_check
      %p128 = pneg %p41
    $region27: #{tpu_custom_call.1} parent=1 // pred_check_branch
      %130 = sbr.rel (%p128) target = $region29
    $region28: #{tpu_custom_call.1} parent=1 // pred_region
      %v131 = vld [vmem:[#allocation2] sm:$0xff]
      %v132 = vld [vmem:[%s2] sm:$0x1]
      %v134 = vlaneseq
      %v135 = vshrl.u32 %v134, 7
      %v136 = vsub.s32 0, %v135
      %v137 = vrot.slane %v132, %v136
      %v139 = vadd.f32 %v131, %v137
      %v140 = vmax.f32 %v139, 0.0
      %141 = vst [vmem:[#allocation8] sm:$0xff] %v140
    $region29: #{tpu_custom_call.1} parent=1 // pred_fallthru
      _
    // Predicated region
    $region30: #{tpu_custom_call.1} parent=1 // pred_check
      _
    $region31: #{tpu_custom_call.1} parent=1 // pred_check_branch
      %143 = sbr.rel (0) target = $region33
    $region32: #{tpu_custom_call.1} parent=1 // pred_region
      %s145 = ssub.s32 128, 128
      %146 = vsyncadd [#allocation5], %s145
      %s148 = sshll.u32 [#allocation8], 4
      %s149 = int_to_ptr.vmem [resolvable:$true] %s148
      %151 = dma.vmem_to_hbm [thread:$0]  %s149, 128, %s3, [#allocation5]
    $region33: #{tpu_custom_call.1} parent=1 // pred_fallthru
      _
    // Predicated region
    $region34: #{tpu_custom_call.1} parent=1 // pred_check
      _
    $region35: #{tpu_custom_call.1} parent=1 // pred_check_branch
      %153 = sbr.rel (0) target = $region37
    $region36: #{tpu_custom_call.1} parent=1 // pred_region
      %154 = dma.done [#allocation5], 128
    $region37: #{tpu_custom_call.1} parent=1 // pred_fallthru
      _
    %155 = vsyncpa [#allocation4], 1
    %156 = vsyncpa [#allocation7], 1
    %157 = vsyncpa [#allocation5], 1

</llo_original>
